<compile_context>
chip_gen: v5e
topology: v5e:2x2
jax: 0.10.0
libtpu: 0.0.40
codegen_flags: <defaults>
</compile_context>

<pallas_src>
import jax
import jax.numpy as jnp
from jax import lax
from jax.experimental import pallas as pl
from jax.experimental.pallas import tpu as pltpu

REPR_DIM = 256


# ---- int32 views of the uint32 hash constants (two's-complement bits) ------
def _as_i32(x):
    x &= 0xFFFFFFFF
    return x - (1 << 32) if x >= (1 << 31) else x


_M1 = _as_i32(0x7FEB352D)          # lowbias32 multiplier 1
_M2 = _as_i32(0x846CA68B)          # lowbias32 multiplier 2
_GOLDEN = 0x9E3779B9               # golden-ratio Weyl increment (per stream)
_NSUM = 12                         # Irwin-Hall order: sum of 12 U(0,1), var=1
_NHASH = _NSUM // 2                # each 32-bit hash yields two 16-bit uniforms
_STREAM_C = [_as_i32(k * _GOLDEN) for k in range(_NHASH)]


def _hash32(x):
    """lowbias32 integer finalizer in int32 wraparound arithmetic.

    Logical right shifts are emulated as arithmetic-shift + mask so everything
    stays plain int32 (xor / and / shift / mul on the VPU).
    """
    x = x ^ ((x >> 16) & 0xFFFF)
    x = x * _M1
    x = x ^ ((x >> 15) & 0x1FFFF)
    x = x * _M2
    x = x ^ ((x >> 16) & 0xFFFF)
    return x


def _randn_kernel(seed_ref, o_ref):
    """Fill one (tile_rows, 256) f32 tile with ~N(0,1) samples.

    Counter-based: each element depends only on (seed, global element index),
    so tiles are independent -> the grid axis is embarrassingly parallel and
    the result is deterministic regardless of tiling.
    """
    tile_rows, d = o_ref.shape
    seed = seed_ref[0]
    row0 = pl.program_id(0) * tile_rows
    rows = lax.broadcasted_iota(jnp.int32, (tile_rows, d), 0) + row0
    cols = lax.broadcasted_iota(jnp.int32, (tile_rows, d), 1)
    n = rows * d + cols                       # unique per output element

    acc = jnp.zeros((tile_rows, d), jnp.int32)
    for k in range(_NHASH):                   # unrolled at trace time
        h = _hash32(n ^ (seed + _STREAM_C[k]))
        acc = acc + ((h >> 16) & 0xFFFF) + (h & 0xFFFF)   # two 16-bit uniforms

    # Irwin-Hall(12): sum of 12 U(0,1) has mean 6, variance 1.
    # TODO(synk): swap in an exact Gaussian transform (Box-Muller / erfinv) if
    # tail-exact parity with torch.randn is ever required; this keeps the
    # kernel on universally-supported VPU ops.
    o_ref[...] = acc.astype(jnp.float32) * (1.0 / 65536.0) - (_NSUM / 2.0)


def _pick_tile_rows(total_rows, target_rows=1024):
    """Largest multiple of 8 that divides total_rows and is <= target_rows."""
    t = min(total_rows, target_rows)
    t -= t % 8
    t = max(t, 8)
    while total_rows % t:
        t -= 8
    return t


def mock_model_forward(states, actions, *, bs, n_steps, repr_dim=REPR_DIM, seed=0):
    """Pallas equivalent of MockModel.forward.

    Args (ignored, kept for signature parity with the PyTorch module):
        states : [B, T, Ch, H, W]
        actions: [B, T-1, 2]
    Returns:
        predictions: [bs, n_steps, repr_dim] float32, ~N(0, 1)
    """
    del states, actions  # forward() ignores its inputs, exactly like the module
    # TODO(synk): torch.randn advances a stateful global RNG per call; here the
    # output is a pure function of the explicit `seed` argument instead.

    bt = bs * n_steps
    bt_pad = ((bt + 7) // 8) * 8          # sublane alignment (rare ragged case)
    tile = _pick_tile_rows(bt_pad)
    grid = (bt_pad // tile,)

    seed_arr = jnp.array([seed], dtype=jnp.int32)
    elems = bt_pad * repr_dim
    cost = pl.CostEstimate(
        flops=80 * elems,                 # ~80 VPU int/float ops per element
        transcendentals=0,
        bytes_accessed=elems * 4 + 4,
    )

    flat = pl.pallas_call(
        _randn_kernel,
        out_shape=jax.ShapeDtypeStruct((bt_pad, repr_dim), jnp.float32),
        grid=grid,
        in_specs=[pl.BlockSpec(memory_space=pltpu.MemorySpace.SMEM)],
        out_specs=pl.BlockSpec((tile, repr_dim), lambda i: (i, 0)),
        compiler_params=pltpu.CompilerParams(
            dimension_semantics=("parallel",)),
        cost_estimate=cost,
    )(seed_arr)

    if bt_pad != bt:                      # only pay the slice in the ragged case
        flat = flat[:bt]
    return flat.reshape(bs, n_steps, repr_dim)   # row-major reshape: free


if __name__ == "__main__":
    # Small shapes consistent with the module's documented interface.
    B, T, CH, H, W = 2, 8, 4, 16, 16

    key = jax.random.PRNGKey(0)
    k_states, k_actions = jax.random.split(key)
    states = jax.random.normal(k_states, (B, T, CH, H, W), dtype=jnp.float32)
    actions = jax.random.normal(k_actions, (B, T - 1, 2), dtype=jnp.float32)

    preds = mock_model_forward(states, actions, bs=B, n_steps=T, seed=0)
    preds = jax.block_until_ready(preds)

    assert preds.shape == (B, T, REPR_DIM), preds.shape
    assert preds.dtype == jnp.float32
    assert bool(jnp.all(jnp.isfinite(preds)))
    # Sanity: should look standard-normal-ish.
    assert abs(float(preds.mean())) < 0.2, float(preds.mean())
    assert 0.7 < float(preds.std()) < 1.3, float(preds.std())

    print("KERNEL_OK")
</pallas_src>

<mosaic_0001>
module attributes {stable_mosaic.version = 11 : i64} {
  func.func @_randn_kernel(%arg0: i32, %arg1: memref<1xi32, #tpu.memory_space<smem>>, %arg2: memref<16x256xf32, #tpu.memory_space<vmem>>) attributes {dimension_semantics = [#tpu.dimension_semantics<parallel>], iteration_bounds = array<i64: 1>, scalar_prefetch = 0 : i64, scratch_operands = 0 : i64, tpu.core_type = #tpu.core_type<tc>, window_params = [{transform_indices = @transform_0, window_bounds = array<i64: 1>}, {transform_indices = @transform_1, window_bounds = array<i64: 16, 256>}]} {
    %c0 = arith.constant 0 : index
    %0 = memref.load %arg1[%c0] : memref<1xi32, #tpu.memory_space<smem>>
    %c16_i32 = arith.constant 16 : i32
    %1 = arith.muli %arg0, %c16_i32 : i32
    %2 = tpu.iota {dimensions = array<i32: 0>} : vector<16x256xi32>
    %3 = vector.broadcast %1 : i32 to vector<16x256xi32>
    %4 = arith.addi %2, %3 : vector<16x256xi32>
    %5 = tpu.iota {dimensions = array<i32: 1>} : vector<16x256xi32>
    %c256_i32 = arith.constant 256 : i32
    %6 = vector.broadcast %c256_i32 : i32 to vector<16x256xi32>
    %7 = arith.muli %4, %6 : vector<16x256xi32>
    %8 = arith.addi %7, %5 : vector<16x256xi32>
    %c0_i32 = arith.constant 0 : i32
    %9 = vector.broadcast %c0_i32 : i32 to vector<16x256xi32>
    %c0_i32_0 = arith.constant 0 : i32
    %10 = arith.addi %0, %c0_i32_0 : i32
    %11 = vector.broadcast %10 : i32 to vector<16x256xi32>
    %12 = arith.xori %8, %11 : vector<16x256xi32>
    %c16_i32_1 = arith.constant 16 : i32
    %13 = vector.broadcast %c16_i32_1 : i32 to vector<16x256xi32>
    %14 = arith.shrsi %12, %13 : vector<16x256xi32>
    %c65535_i32 = arith.constant 65535 : i32
    %15 = vector.broadcast %c65535_i32 : i32 to vector<16x256xi32>
    %16 = arith.andi %14, %15 : vector<16x256xi32>
    %17 = arith.xori %12, %16 : vector<16x256xi32>
    %c2146121005_i32 = arith.constant 2146121005 : i32
    %18 = vector.broadcast %c2146121005_i32 : i32 to vector<16x256xi32>
    %19 = arith.muli %17, %18 : vector<16x256xi32>
    %c15_i32 = arith.constant 15 : i32
    %20 = vector.broadcast %c15_i32 : i32 to vector<16x256xi32>
    %21 = arith.shrsi %19, %20 : vector<16x256xi32>
    %c131071_i32 = arith.constant 131071 : i32
    %22 = vector.broadcast %c131071_i32 : i32 to vector<16x256xi32>
    %23 = arith.andi %21, %22 : vector<16x256xi32>
    %24 = arith.xori %19, %23 : vector<16x256xi32>
    %c-2073254261_i32 = arith.constant -2073254261 : i32
    %25 = vector.broadcast %c-2073254261_i32 : i32 to vector<16x256xi32>
    %26 = arith.muli %24, %25 : vector<16x256xi32>
    %c16_i32_2 = arith.constant 16 : i32
    %27 = vector.broadcast %c16_i32_2 : i32 to vector<16x256xi32>
    %28 = arith.shrsi %26, %27 : vector<16x256xi32>
    %c65535_i32_3 = arith.constant 65535 : i32
    %29 = vector.broadcast %c65535_i32_3 : i32 to vector<16x256xi32>
    %30 = arith.andi %28, %29 : vector<16x256xi32>
    %31 = arith.xori %26, %30 : vector<16x256xi32>
    %c16_i32_4 = arith.constant 16 : i32
    %32 = vector.broadcast %c16_i32_4 : i32 to vector<16x256xi32>
    %33 = arith.shrsi %31, %32 : vector<16x256xi32>
    %c65535_i32_5 = arith.constant 65535 : i32
    %34 = vector.broadcast %c65535_i32_5 : i32 to vector<16x256xi32>
    %35 = arith.andi %33, %34 : vector<16x256xi32>
    %36 = arith.addi %9, %35 : vector<16x256xi32>
    %c65535_i32_6 = arith.constant 65535 : i32
    %37 = vector.broadcast %c65535_i32_6 : i32 to vector<16x256xi32>
    %38 = arith.andi %31, %37 : vector<16x256xi32>
    %39 = arith.addi %36, %38 : vector<16x256xi32>
    %c-1640531527_i32 = arith.constant -1640531527 : i32
    %40 = arith.addi %0, %c-1640531527_i32 : i32
    %41 = vector.broadcast %40 : i32 to vector<16x256xi32>
    %42 = arith.xori %8, %41 : vector<16x256xi32>
    %c16_i32_7 = arith.constant 16 : i32
    %43 = vector.broadcast %c16_i32_7 : i32 to vector<16x256xi32>
    %44 = arith.shrsi %42, %43 : vector<16x256xi32>
    %c65535_i32_8 = arith.constant 65535 : i32
    %45 = vector.broadcast %c65535_i32_8 : i32 to vector<16x256xi32>
    %46 = arith.andi %44, %45 : vector<16x256xi32>
    %47 = arith.xori %42, %46 : vector<16x256xi32>
    %c2146121005_i32_9 = arith.constant 2146121005 : i32
    %48 = vector.broadcast %c2146121005_i32_9 : i32 to vector<16x256xi32>
    %49 = arith.muli %47, %48 : vector<16x256xi32>
    %c15_i32_10 = arith.constant 15 : i32
    %50 = vector.broadcast %c15_i32_10 : i32 to vector<16x256xi32>
    %51 = arith.shrsi %49, %50 : vector<16x256xi32>
    %c131071_i32_11 = arith.constant 131071 : i32
    %52 = vector.broadcast %c131071_i32_11 : i32 to vector<16x256xi32>
    %53 = arith.andi %51, %52 : vector<16x256xi32>
    %54 = arith.xori %49, %53 : vector<16x256xi32>
    %c-2073254261_i32_12 = arith.constant -2073254261 : i32
    %55 = vector.broadcast %c-2073254261_i32_12 : i32 to vector<16x256xi32>
    %56 = arith.muli %54, %55 : vector<16x256xi32>
    %c16_i32_13 = arith.constant 16 : i32
    %57 = vector.broadcast %c16_i32_13 : i32 to vector<16x256xi32>
    %58 = arith.shrsi %56, %57 : vector<16x256xi32>
    %c65535_i32_14 = arith.constant 65535 : i32
    %59 = vector.broadcast %c65535_i32_14 : i32 to vector<16x256xi32>
    %60 = arith.andi %58, %59 : vector<16x256xi32>
    %61 = arith.xori %56, %60 : vector<16x256xi32>
    %c16_i32_15 = arith.constant 16 : i32
    %62 = vector.broadcast %c16_i32_15 : i32 to vector<16x256xi32>
    %63 = arith.shrsi %61, %62 : vector<16x256xi32>
    %c65535_i32_16 = arith.constant 65535 : i32
    %64 = vector.broadcast %c65535_i32_16 : i32 to vector<16x256xi32>
    %65 = arith.andi %63, %64 : vector<16x256xi32>
    %66 = arith.addi %39, %65 : vector<16x256xi32>
    %c65535_i32_17 = arith.constant 65535 : i32
    %67 = vector.broadcast %c65535_i32_17 : i32 to vector<16x256xi32>
    %68 = arith.andi %61, %67 : vector<16x256xi32>
    %69 = arith.addi %66, %68 : vector<16x256xi32>
    %c1013904242_i32 = arith.constant 1013904242 : i32
    %70 = arith.addi %0, %c1013904242_i32 : i32
    %71 = vector.broadcast %70 : i32 to vector<16x256xi32>
    %72 = arith.xori %8, %71 : vector<16x256xi32>
    %c16_i32_18 = arith.constant 16 : i32
    %73 = vector.broadcast %c16_i32_18 : i32 to vector<16x256xi32>
    %74 = arith.shrsi %72, %73 : vector<16x256xi32>
    %c65535_i32_19 = arith.constant 65535 : i32
    %75 = vector.broadcast %c65535_i32_19 : i32 to vector<16x256xi32>
    %76 = arith.andi %74, %75 : vector<16x256xi32>
    %77 = arith.xori %72, %76 : vector<16x256xi32>
    %c2146121005_i32_20 = arith.constant 2146121005 : i32
    %78 = vector.broadcast %c2146121005_i32_20 : i32 to vector<16x256xi32>
    %79 = arith.muli %77, %78 : vector<16x256xi32>
    %c15_i32_21 = arith.constant 15 : i32
    %80 = vector.broadcast %c15_i32_21 : i32 to vector<16x256xi32>
    %81 = arith.shrsi %79, %80 : vector<16x256xi32>
    %c131071_i32_22 = arith.constant 131071 : i32
    %82 = vector.broadcast %c131071_i32_22 : i32 to vector<16x256xi32>
    %83 = arith.andi %81, %82 : vector<16x256xi32>
    %84 = arith.xori %79, %83 : vector<16x256xi32>
    %c-2073254261_i32_23 = arith.constant -2073254261 : i32
    %85 = vector.broadcast %c-2073254261_i32_23 : i32 to vector<16x256xi32>
    %86 = arith.muli %84, %85 : vector<16x256xi32>
    %c16_i32_24 = arith.constant 16 : i32
    %87 = vector.broadcast %c16_i32_24 : i32 to vector<16x256xi32>
    %88 = arith.shrsi %86, %87 : vector<16x256xi32>
    %c65535_i32_25 = arith.constant 65535 : i32
    %89 = vector.broadcast %c65535_i32_25 : i32 to vector<16x256xi32>
    %90 = arith.andi %88, %89 : vector<16x256xi32>
    %91 = arith.xori %86, %90 : vector<16x256xi32>
    %c16_i32_26 = arith.constant 16 : i32
    %92 = vector.broadcast %c16_i32_26 : i32 to vector<16x256xi32>
    %93 = arith.shrsi %91, %92 : vector<16x256xi32>
    %c65535_i32_27 = arith.constant 65535 : i32
    %94 = vector.broadcast %c65535_i32_27 : i32 to vector<16x256xi32>
    %95 = arith.andi %93, %94 : vector<16x256xi32>
    %96 = arith.addi %69, %95 : vector<16x256xi32>
    %c65535_i32_28 = arith.constant 65535 : i32
    %97 = vector.broadcast %c65535_i32_28 : i32 to vector<16x256xi32>
    %98 = arith.andi %91, %97 : vector<16x256xi32>
    %99 = arith.addi %96, %98 : vector<16x256xi32>
    %c-626627285_i32 = arith.constant -626627285 : i32
    %100 = arith.addi %0, %c-626627285_i32 : i32
    %101 = vector.broadcast %100 : i32 to vector<16x256xi32>
    %102 = arith.xori %8, %101 : vector<16x256xi32>
    %c16_i32_29 = arith.constant 16 : i32
    %103 = vector.broadcast %c16_i32_29 : i32 to vector<16x256xi32>
    %104 = arith.shrsi %102, %103 : vector<16x256xi32>
    %c65535_i32_30 = arith.constant 65535 : i32
    %105 = vector.broadcast %c65535_i32_30 : i32 to vector<16x256xi32>
    %106 = arith.andi %104, %105 : vector<16x256xi32>
    %107 = arith.xori %102, %106 : vector<16x256xi32>
    %c2146121005_i32_31 = arith.constant 2146121005 : i32
    %108 = vector.broadcast %c2146121005_i32_31 : i32 to vector<16x256xi32>
    %109 = arith.muli %107, %108 : vector<16x256xi32>
    %c15_i32_32 = arith.constant 15 : i32
    %110 = vector.broadcast %c15_i32_32 : i32 to vector<16x256xi32>
    %111 = arith.shrsi %109, %110 : vector<16x256xi32>
    %c131071_i32_33 = arith.constant 131071 : i32
    %112 = vector.broadcast %c131071_i32_33 : i32 to vector<16x256xi32>
    %113 = arith.andi %111, %112 : vector<16x256xi32>
    %114 = arith.xori %109, %113 : vector<16x256xi32>
    %c-2073254261_i32_34 = arith.constant -2073254261 : i32
    %115 = vector.broadcast %c-2073254261_i32_34 : i32 to vector<16x256xi32>
    %116 = arith.muli %114, %115 : vector<16x256xi32>
    %c16_i32_35 = arith.constant 16 : i32
    %117 = vector.broadcast %c16_i32_35 : i32 to vector<16x256xi32>
    %118 = arith.shrsi %116, %117 : vector<16x256xi32>
    %c65535_i32_36 = arith.constant 65535 : i32
    %119 = vector.broadcast %c65535_i32_36 : i32 to vector<16x256xi32>
    %120 = arith.andi %118, %119 : vector<16x256xi32>
    %121 = arith.xori %116, %120 : vector<16x256xi32>
    %c16_i32_37 = arith.constant 16 : i32
    %122 = vector.broadcast %c16_i32_37 : i32 to vector<16x256xi32>
    %123 = arith.shrsi %121, %122 : vector<16x256xi32>
    %c65535_i32_38 = arith.constant 65535 : i32
    %124 = vector.broadcast %c65535_i32_38 : i32 to vector<16x256xi32>
    %125 = arith.andi %123, %124 : vector<16x256xi32>
    %126 = arith.addi %99, %125 : vector<16x256xi32>
    %c65535_i32_39 = arith.constant 65535 : i32
    %127 = vector.broadcast %c65535_i32_39 : i32 to vector<16x256xi32>
    %128 = arith.andi %121, %127 : vector<16x256xi32>
    %129 = arith.addi %126, %128 : vector<16x256xi32>
    %c2027808484_i32 = arith.constant 2027808484 : i32
    %130 = arith.addi %0, %c2027808484_i32 : i32
    %131 = vector.broadcast %130 : i32 to vector<16x256xi32>
    %132 = arith.xori %8, %131 : vector<16x256xi32>
    %c16_i32_40 = arith.constant 16 : i32
    %133 = vector.broadcast %c16_i32_40 : i32 to vector<16x256xi32>
    %134 = arith.shrsi %132, %133 : vector<16x256xi32>
    %c65535_i32_41 = arith.constant 65535 : i32
    %135 = vector.broadcast %c65535_i32_41 : i32 to vector<16x256xi32>
    %136 = arith.andi %134, %135 : vector<16x256xi32>
    %137 = arith.xori %132, %136 : vector<16x256xi32>
    %c2146121005_i32_42 = arith.constant 2146121005 : i32
    %138 = vector.broadcast %c2146121005_i32_42 : i32 to vector<16x256xi32>
    %139 = arith.muli %137, %138 : vector<16x256xi32>
    %c15_i32_43 = arith.constant 15 : i32
    %140 = vector.broadcast %c15_i32_43 : i32 to vector<16x256xi32>
    %141 = arith.shrsi %139, %140 : vector<16x256xi32>
    %c131071_i32_44 = arith.constant 131071 : i32
    %142 = vector.broadcast %c131071_i32_44 : i32 to vector<16x256xi32>
    %143 = arith.andi %141, %142 : vector<16x256xi32>
    %144 = arith.xori %139, %143 : vector<16x256xi32>
    %c-2073254261_i32_45 = arith.constant -2073254261 : i32
    %145 = vector.broadcast %c-2073254261_i32_45 : i32 to vector<16x256xi32>
    %146 = arith.muli %144, %145 : vector<16x256xi32>
    %c16_i32_46 = arith.constant 16 : i32
    %147 = vector.broadcast %c16_i32_46 : i32 to vector<16x256xi32>
    %148 = arith.shrsi %146, %147 : vector<16x256xi32>
    %c65535_i32_47 = arith.constant 65535 : i32
    %149 = vector.broadcast %c65535_i32_47 : i32 to vector<16x256xi32>
    %150 = arith.andi %148, %149 : vector<16x256xi32>
    %151 = arith.xori %146, %150 : vector<16x256xi32>
    %c16_i32_48 = arith.constant 16 : i32
    %152 = vector.broadcast %c16_i32_48 : i32 to vector<16x256xi32>
    %153 = arith.shrsi %151, %152 : vector<16x256xi32>
    %c65535_i32_49 = arith.constant 65535 : i32
    %154 = vector.broadcast %c65535_i32_49 : i32 to vector<16x256xi32>
    %155 = arith.andi %153, %154 : vector<16x256xi32>
    %156 = arith.addi %129, %155 : vector<16x256xi32>
    %c65535_i32_50 = arith.constant 65535 : i32
    %157 = vector.broadcast %c65535_i32_50 : i32 to vector<16x256xi32>
    %158 = arith.andi %151, %157 : vector<16x256xi32>
    %159 = arith.addi %156, %158 : vector<16x256xi32>
    %c387276957_i32 = arith.constant 387276957 : i32
    %160 = arith.addi %0, %c387276957_i32 : i32
    %161 = vector.broadcast %160 : i32 to vector<16x256xi32>
    %162 = arith.xori %8, %161 : vector<16x256xi32>
    %c16_i32_51 = arith.constant 16 : i32
    %163 = vector.broadcast %c16_i32_51 : i32 to vector<16x256xi32>
    %164 = arith.shrsi %162, %163 : vector<16x256xi32>
    %c65535_i32_52 = arith.constant 65535 : i32
    %165 = vector.broadcast %c65535_i32_52 : i32 to vector<16x256xi32>
    %166 = arith.andi %164, %165 : vector<16x256xi32>
    %167 = arith.xori %162, %166 : vector<16x256xi32>
    %c2146121005_i32_53 = arith.constant 2146121005 : i32
    %168 = vector.broadcast %c2146121005_i32_53 : i32 to vector<16x256xi32>
    %169 = arith.muli %167, %168 : vector<16x256xi32>
    %c15_i32_54 = arith.constant 15 : i32
    %170 = vector.broadcast %c15_i32_54 : i32 to vector<16x256xi32>
    %171 = arith.shrsi %169, %170 : vector<16x256xi32>
    %c131071_i32_55 = arith.constant 131071 : i32
    %172 = vector.broadcast %c131071_i32_55 : i32 to vector<16x256xi32>
    %173 = arith.andi %171, %172 : vector<16x256xi32>
    %174 = arith.xori %169, %173 : vector<16x256xi32>
    %c-2073254261_i32_56 = arith.constant -2073254261 : i32
    %175 = vector.broadcast %c-2073254261_i32_56 : i32 to vector<16x256xi32>
    %176 = arith.muli %174, %175 : vector<16x256xi32>
    %c16_i32_57 = arith.constant 16 : i32
    %177 = vector.broadcast %c16_i32_57 : i32 to vector<16x256xi32>
    %178 = arith.shrsi %176, %177 : vector<16x256xi32>
    %c65535_i32_58 = arith.constant 65535 : i32
    %179 = vector.broadcast %c65535_i32_58 : i32 to vector<16x256xi32>
    %180 = arith.andi %178, %179 : vector<16x256xi32>
    %181 = arith.xori %176, %180 : vector<16x256xi32>
    %c16_i32_59 = arith.constant 16 : i32
    %182 = vector.broadcast %c16_i32_59 : i32 to vector<16x256xi32>
    %183 = arith.shrsi %181, %182 : vector<16x256xi32>
    %c65535_i32_60 = arith.constant 65535 : i32
    %184 = vector.broadcast %c65535_i32_60 : i32 to vector<16x256xi32>
    %185 = arith.andi %183, %184 : vector<16x256xi32>
    %186 = arith.addi %159, %185 : vector<16x256xi32>
    %c65535_i32_61 = arith.constant 65535 : i32
    %187 = vector.broadcast %c65535_i32_61 : i32 to vector<16x256xi32>
    %188 = arith.andi %181, %187 : vector<16x256xi32>
    %189 = arith.addi %186, %188 : vector<16x256xi32>
    %190 = arith.sitofp %189 : vector<16x256xi32> to vector<16x256xf32>
    %cst = arith.constant 1.52587891E-5 : f32
    %191 = vector.broadcast %cst : f32 to vector<16x256xf32>
    %192 = arith.mulf %190, %191 : vector<16x256xf32>
    %cst_62 = arith.constant 6.000000e+00 : f32
    %193 = vector.broadcast %cst_62 : f32 to vector<16x256xf32>
    %194 = arith.subf %192, %193 : vector<16x256xf32>
    %c0_63 = arith.constant 0 : index
    %c0_64 = arith.constant 0 : index
    %195 = vector.load %arg2[%c0_63, %c0_64] : memref<16x256xf32, #tpu.memory_space<vmem>>, vector<16x256xf32>
    tpu.vector_store %arg2[%c0_63, %c0_64], %194 {strides = array<i32>} : memref<16x256xf32, #tpu.memory_space<vmem>>, vector<16x256xf32>,
    return
  }
  func.func @transform_0(%arg0: i32) -> i32 {
    %c0_i32 = arith.constant 0 : i32
    %c0_i32_0 = arith.constant 0 : i32
    return %c0_i32 : i32
  }
  func.func @transform_1(%arg0: i32) -> (i32, i32) {
    %c0_i32 = arith.constant 0 : i32
    %c0_i32_0 = arith.constant 0 : i32
    return %arg0, %c0_i32 : i32, i32
  }
}

</mosaic_0001>

<llo_original>
// kernel: tpu_custom_call.1
$region0: #{tpu_custom_call.1}
  #allocation0 [shape = 'u32[]', space=smem, size = 0x4, offset = 0x4, fixed_abs, tag = 'smem constant byte address 0x4 - core index']
  #allocation1 [shape = 'u32[72,128]{1,0:T(1,128)}', space=vmem, size = 0x9000, scoped, tag = 'internal scratch']
  #allocation2 [shape = 's32[1]{0:T(128)S(6)}', space=smem, size = 0x200, scoped, tag = 'scoped memory for tpu_custom_call.1']
  %s0 = inlined_call_operand.<no memory space> [shape: s32[1], index: 0, kind: input, shape index: {}]
  %s1 = inlined_call_operand.hbm [shape: f32[16,256], index: 1, kind: output, shape index: {}]
  %s2 = sld [smem:[#allocation0]]
  $region14: #{tpu_custom_call.1} parent=0
    _
  %s4 = ssub.s32 1, %s2
  %s5 = scalar_select 0, %s4, %s2
  %6 = sst [smem:[#allocation2]] %s0
  $region1: #{tpu_custom_call.1} parent=0
    #allocation3 [shape = 'u8[16384]{0}', space=vmem, size = 0x4000, scoped, tag = 'output window, operand 0, single buffered']
    #allocation4 [shape = 's32[1]{0}', space=sflag, size = 0x4, scoped, tag = 'scoped memory for tpu_custom_call.1']
    %7 = vsyncpa [#allocation4], 0
    // Predicated region
    $region2: #{tpu_custom_call.1} parent=1 // pred_check
      _
    $region3: #{tpu_custom_call.1} parent=1 // pred_check_branch
      %9 = sbr.rel (0) target = $region5
    $region4: #{tpu_custom_call.1} parent=1 // pred_region
      _
    $region5: #{tpu_custom_call.1} parent=1 // pred_fallthru
      _
    %s10 = sld [smem:[#allocation2]]
    %s11 = smul.u32 0, 16
    %v12 = vlaneseq
    %v13 = vshrl.u32 %v12, 7
    %v14 = vadd.s32 %v13, 8
    %v15 = vstv %s11
    %v16 = vadd.s32 %v13, %v15
    %v17 = vadd.s32 %v14, %v15
    %v18 = vlaneseq
    %v19 = vand.u32 %v18, 127
    %v20 = vadd.s32 %v19, 128
    %v21 = vmul.u32 %v16, 256
    %v22 = vmul.u32 %v17, 256
    %v23 = vadd.s32 %v21, %v19
    %v24 = vadd.s32 %v21, %v20
    %v25 = vadd.s32 %v22, %v19
    %v26 = vadd.s32 %v22, %v20
    %v27 = vstv %s10
    %v28 = vxor.u32 %v23, %v27
    %v29 = vxor.u32 %v24, %v27
    %v30 = vxor.u32 %v25, %v27
    %v31 = vxor.u32 %v26, %v27
    %v32 = vshra.s32 %v28, 16
    %v33 = vshra.s32 %v29, 16
    %v34 = vshra.s32 %v30, 16
    %v35 = vshra.s32 %v31, 16
    %v36 = vand.u32 %v32, 65535
    %v37 = vand.u32 %v33, 65535
    %v38 = vand.u32 %v34, 65535
    %v39 = vand.u32 %v35, 65535
    %v40 = vxor.u32 %v28, %v36
    %v41 = vxor.u32 %v29, %v37
    %v42 = vxor.u32 %v30, %v38
    %v43 = vxor.u32 %v31, %v39
    %v44 = vmul.u32 %v40, 2146121005
    %v45 = vmul.u32 %v41, 2146121005
    %v46 = vmul.u32 %v42, 2146121005
    %v47 = vmul.u32 %v43, 2146121005
    %v48 = vshra.s32 %v44, 15
    %v49 = vshra.s32 %v45, 15
    %v50 = vshra.s32 %v46, 15
    %v51 = vshra.s32 %v47, 15
    %v52 = vand.u32 %v48, 131071
    %v53 = vand.u32 %v49, 131071
    %v54 = vand.u32 %v50, 131071
    %v55 = vand.u32 %v51, 131071
    %v56 = vxor.u32 %v44, %v52
    %v57 = vxor.u32 %v45, %v53
    %v58 = vxor.u32 %v46, %v54
    %v59 = vxor.u32 %v47, %v55
    %v60 = vmul.u32 %v56, 2221713035
    %v61 = vmul.u32 %v57, 2221713035
    %v62 = vmul.u32 %v58, 2221713035
    %v63 = vmul.u32 %v59, 2221713035
    %v64 = vshra.s32 %v60, 16
    %v65 = vshra.s32 %v61, 16
    %v66 = vshra.s32 %v62, 16
    %v67 = vshra.s32 %v63, 16
    %v68 = vand.u32 %v64, 65535
    %v69 = vand.u32 %v65, 65535
    %v70 = vand.u32 %v66, 65535
    %v71 = vand.u32 %v67, 65535
    %v72 = vxor.u32 %v60, %v68
    %v73 = vxor.u32 %v61, %v69
    %v74 = vxor.u32 %v62, %v70
    %v75 = vxor.u32 %v63, %v71
    %v76 = vshra.s32 %v72, 16
    %v77 = vshra.s32 %v73, 16
    %v78 = vshra.s32 %v74, 16
    %v79 = vshra.s32 %v75, 16
    %v80 = vand.u32 %v76, 65535
    %v81 = vand.u32 %v77, 65535
    %v82 = vand.u32 %v78, 65535
    %v83 = vand.u32 %v79, 65535
    %v84 = vand.u32 %v72, 65535
    %v85 = vand.u32 %v73, 65535
    %v86 = vand.u32 %v74, 65535
    %v87 = vand.u32 %v75, 65535
    %v88 = vadd.s32 %v80, %v84
    %v89 = vadd.s32 %v81, %v85
    %v90 = vadd.s32 %v82, %v86
    %v91 = vadd.s32 %v83, %v87
    %s92 = sadd.s32 %s10, 2654435769
    %v93 = vstv %s92
    %v94 = vxor.u32 %v23, %v93
    %v95 = vxor.u32 %v24, %v93
    %v96 = vxor.u32 %v25, %v93
    %v97 = vxor.u32 %v26, %v93
    %v98 = vshra.s32 %v94, 16
    %v99 = vshra.s32 %v95, 16
    %v100 = vshra.s32 %v96, 16
    %v101 = vshra.s32 %v97, 16
    %v102 = vand.u32 %v98, 65535
    %v103 = vand.u32 %v99, 65535
    %v104 = vand.u32 %v100, 65535
    %v105 = vand.u32 %v101, 65535
    %v106 = vxor.u32 %v94, %v102
    %v107 = vxor.u32 %v95, %v103
    %v108 = vxor.u32 %v96, %v104
    %v109 = vxor.u32 %v97, %v105
    %v110 = vmul.u32 %v106, 2146121005
    %v111 = vmul.u32 %v107, 2146121005
    %v112 = vmul.u32 %v108, 2146121005
    %v113 = vmul.u32 %v109, 2146121005
    %v114 = vshra.s32 %v110, 15
    %v115 = vshra.s32 %v111, 15
    %v116 = vshra.s32 %v112, 15
    %v117 = vshra.s32 %v113, 15
    %v118 = vand.u32 %v114, 131071
    %v119 = vand.u32 %v115, 131071
    %v120 = vand.u32 %v116, 131071
    %v121 = vand.u32 %v117, 131071
    %v122 = vxor.u32 %v110, %v118
    %v123 = vxor.u32 %v111, %v119
    %v124 = vxor.u32 %v112, %v120
    %v125 = vxor.u32 %v113, %v121
    %v126 = vmul.u32 %v122, 2221713035
    %v127 = vmul.u32 %v123, 2221713035
    %v128 = vmul.u32 %v124, 2221713035
    %v129 = vmul.u32 %v125, 2221713035
    %v130 = vshra.s32 %v126, 16
    %v131 = vshra.s32 %v127, 16
    %v132 = vshra.s32 %v128, 16
    %v133 = vshra.s32 %v129, 16
    %v134 = vand.u32 %v130, 65535
    %v135 = vand.u32 %v131, 65535
    %v136 = vand.u32 %v132, 65535
    %v137 = vand.u32 %v133, 65535
    %v138 = vxor.u32 %v126, %v134
    %v139 = vxor.u32 %v127, %v135
    %v140 = vxor.u32 %v128, %v136
    %v141 = vxor.u32 %v129, %v137
    %v142 = vshra.s32 %v138, 16
    %v143 = vshra.s32 %v139, 16
    %v144 = vshra.s32 %v140, 16
    %v145 = vshra.s32 %v141, 16
    %v146 = vand.u32 %v142, 65535
    %v147 = vand.u32 %v143, 65535
    %v148 = vand.u32 %v144, 65535
    %v149 = vand.u32 %v145, 65535
    %v150 = vadd.s32 %v88, %v146
    %v151 = vadd.s32 %v89, %v147
    %v152 = vadd.s32 %v90, %v148
    %v153 = vadd.s32 %v91, %v149
    %v154 = vand.u32 %v138, 65535
    %v155 = vand.u32 %v139, 65535
    %v156 = vand.u32 %v140, 65535
    %v157 = vand.u32 %v141, 65535
    %v158 = vadd.s32 %v150, %v154
    %v159 = vadd.s32 %v151, %v155
    %v160 = vadd.s32 %v152, %v156
    %v161 = vadd.s32 %v153, %v157
    %s162 = sadd.s32 %s10, 1013904242
    %v163 = vstv %s162
    %v164 = vxor.u32 %v23, %v163
    %v165 = vxor.u32 %v24, %v163
    %v166 = vxor.u32 %v25, %v163
    %v167 = vxor.u32 %v26, %v163
    %v168 = vshra.s32 %v164, 16
    %v169 = vshra.s32 %v165, 16
    %v170 = vshra.s32 %v166, 16
    %v171 = vshra.s32 %v167, 16
    %v172 = vand.u32 %v168, 65535
    %v173 = vand.u32 %v169, 65535
    %v174 = vand.u32 %v170, 65535
    %v175 = vand.u32 %v171, 65535
    %v176 = vxor.u32 %v164, %v172
    %v177 = vxor.u32 %v165, %v173
    %v178 = vxor.u32 %v166, %v174
    %v179 = vxor.u32 %v167, %v175
    %v180 = vmul.u32 %v176, 2146121005
    %v181 = vmul.u32 %v177, 2146121005
    %v182 = vmul.u32 %v178, 2146121005
    %v183 = vmul.u32 %v179, 2146121005
    %v184 = vshra.s32 %v180, 15
    %v185 = vshra.s32 %v181, 15
    %v186 = vshra.s32 %v182, 15
    %v187 = vshra.s32 %v183, 15
    %v188 = vand.u32 %v184, 131071
    %v189 = vand.u32 %v185, 131071
    %v190 = vand.u32 %v186, 131071
    %v191 = vand.u32 %v187, 131071
    %v192 = vxor.u32 %v180, %v188
    %v193 = vxor.u32 %v181, %v189
    %v194 = vxor.u32 %v182, %v190
    %v195 = vxor.u32 %v183, %v191
    %v196 = vmul.u32 %v192, 2221713035
    %v197 = vmul.u32 %v193, 2221713035
    %v198 = vmul.u32 %v194, 2221713035
    %v199 = vmul.u32 %v195, 2221713035
    %v200 = vshra.s32 %v196, 16
    %v201 = vshra.s32 %v197, 16
    %v202 = vshra.s32 %v198, 16
    %v203 = vshra.s32 %v199, 16
    %v204 = vand.u32 %v200, 65535
    %v205 = vand.u32 %v201, 65535
    %v206 = vand.u32 %v202, 65535
    %v207 = vand.u32 %v203, 65535
    %v208 = vxor.u32 %v196, %v204
    %v209 = vxor.u32 %v197, %v205
    %v210 = vxor.u32 %v198, %v206
    %v211 = vxor.u32 %v199, %v207
    %v212 = vshra.s32 %v208, 16
    %v213 = vshra.s32 %v209, 16
    %v214 = vshra.s32 %v210, 16
    %v215 = vshra.s32 %v211, 16
    %v216 = vand.u32 %v212, 65535
    %v217 = vand.u32 %v213, 65535
    %v218 = vand.u32 %v214, 65535
    %v219 = vand.u32 %v215, 65535
    %v220 = vadd.s32 %v158, %v216
    %v221 = vadd.s32 %v159, %v217
    %v222 = vadd.s32 %v160, %v218
    %v223 = vadd.s32 %v161, %v219
    %v224 = vand.u32 %v208, 65535
    %v225 = vand.u32 %v209, 65535
    %v226 = vand.u32 %v210, 65535
    %v227 = vand.u32 %v211, 65535
    %v228 = vadd.s32 %v220, %v224
    %v229 = vadd.s32 %v221, %v225
    %v230 = vadd.s32 %v222, %v226
    %v231 = vadd.s32 %v223, %v227
    %s232 = sadd.s32 %s10, 3668340011
    %v233 = vstv %s232
    %v234 = vxor.u32 %v23, %v233
    %v235 = vxor.u32 %v24, %v233
    %v236 = vxor.u32 %v25, %v233
    %v237 = vxor.u32 %v26, %v233
    %v238 = vshra.s32 %v234, 16
    %v239 = vshra.s32 %v235, 16
    %v240 = vshra.s32 %v236, 16
    %v241 = vshra.s32 %v237, 16
    %v242 = vand.u32 %v238, 65535
    %v243 = vand.u32 %v239, 65535
    %v244 = vand.u32 %v240, 65535
    %v245 = vand.u32 %v241, 65535
    %v246 = vxor.u32 %v234, %v242
    %v247 = vxor.u32 %v235, %v243
    %v248 = vxor.u32 %v236, %v244
    %v249 = vxor.u32 %v237, %v245
    %v250 = vmul.u32 %v246, 2146121005
    %v251 = vmul.u32 %v247, 2146121005
    %v252 = vmul.u32 %v248, 2146121005
    %v253 = vmul.u32 %v249, 2146121005
    %v254 = vshra.s32 %v250, 15
    %v255 = vshra.s32 %v251, 15
    %v256 = vshra.s32 %v252, 15
    %v257 = vshra.s32 %v253, 15
    %v258 = vand.u32 %v254, 131071
    %v259 = vand.u32 %v255, 131071
    %v260 = vand.u32 %v256, 131071
    %v261 = vand.u32 %v257, 131071
    %v262 = vxor.u32 %v250, %v258
    %v263 = vxor.u32 %v251, %v259
    %v264 = vxor.u32 %v252, %v260
    %v265 = vxor.u32 %v253, %v261
    %v266 = vmul.u32 %v262, 2221713035
    %v267 = vmul.u32 %v263, 2221713035
    %v268 = vmul.u32 %v264, 2221713035
    %v269 = vmul.u32 %v265, 2221713035
    %v270 = vshra.s32 %v266, 16
    %v271 = vshra.s32 %v267, 16
    %v272 = vshra.s32 %v268, 16
    %v273 = vshra.s32 %v269, 16
    %v274 = vand.u32 %v270, 65535
    %v275 = vand.u32 %v271, 65535
    %v276 = vand.u32 %v272, 65535
    %v277 = vand.u32 %v273, 65535
    %v278 = vxor.u32 %v266, %v274
    %v279 = vxor.u32 %v267, %v275
    %v280 = vxor.u32 %v268, %v276
    %v281 = vxor.u32 %v269, %v277
    %v282 = vshra.s32 %v278, 16
    %v283 = vshra.s32 %v279, 16
    %v284 = vshra.s32 %v280, 16
    %v285 = vshra.s32 %v281, 16
    %v286 = vand.u32 %v282, 65535
    %v287 = vand.u32 %v283, 65535
    %v288 = vand.u32 %v284, 65535
    %v289 = vand.u32 %v285, 65535
    %v290 = vadd.s32 %v228, %v286
    %v291 = vadd.s32 %v229, %v287
    %v292 = vadd.s32 %v230, %v288
    %v293 = vadd.s32 %v231, %v289
    %v294 = vand.u32 %v278, 65535
    %v295 = vand.u32 %v279, 65535
    %v296 = vand.u32 %v280, 65535
    %v297 = vand.u32 %v281, 65535
    %v298 = vadd.s32 %v290, %v294
    %v299 = vadd.s32 %v291, %v295
    %v300 = vadd.s32 %v292, %v296
    %v301 = vadd.s32 %v293, %v297
    %s302 = sadd.s32 %s10, 2027808484
    %v303 = vstv %s302
    %v304 = vxor.u32 %v23, %v303
    %v305 = vxor.u32 %v24, %v303
    %v306 = vxor.u32 %v25, %v303
    %v307 = vxor.u32 %v26, %v303
    %v308 = vshra.s32 %v304, 16
    %v309 = vshra.s32 %v305, 16
    %v310 = vshra.s32 %v306, 16
    %v311 = vshra.s32 %v307, 16
    %v312 = vand.u32 %v308, 65535
    %v313 = vand.u32 %v309, 65535
    %v314 = vand.u32 %v310, 65535
    %v315 = vand.u32 %v311, 65535
    %v316 = vxor.u32 %v304, %v312
    %v317 = vxor.u32 %v305, %v313
    %v318 = vxor.u32 %v306, %v314
    %v319 = vxor.u32 %v307, %v315
    %v320 = vmul.u32 %v316, 2146121005
    %v321 = vmul.u32 %v317, 2146121005
    %v322 = vmul.u32 %v318, 2146121005
    %v323 = vmul.u32 %v319, 2146121005
    %v324 = vshra.s32 %v320, 15
    %v325 = vshra.s32 %v321, 15
    %v326 = vshra.s32 %v322, 15
    %v327 = vshra.s32 %v323, 15
    %v328 = vand.u32 %v324, 131071
    %v329 = vand.u32 %v325, 131071
    %v330 = vand.u32 %v326, 131071
    %v331 = vand.u32 %v327, 131071
    %v332 = vxor.u32 %v320, %v328
    %v333 = vxor.u32 %v321, %v329
    %v334 = vxor.u32 %v322, %v330
    %v335 = vxor.u32 %v323, %v331
    %v336 = vmul.u32 %v332, 2221713035
    %v337 = vmul.u32 %v333, 2221713035
    %v338 = vmul.u32 %v334, 2221713035
    %v339 = vmul.u32 %v335, 2221713035
    %v340 = vshra.s32 %v336, 16
    %v341 = vshra.s32 %v337, 16
    %v342 = vshra.s32 %v338, 16
    %v343 = vshra.s32 %v339, 16
    %v344 = vand.u32 %v340, 65535
    %v345 = vand.u32 %v341, 65535
    %v346 = vand.u32 %v342, 65535
    %v347 = vand.u32 %v343, 65535
    %v348 = vxor.u32 %v336, %v344
    %v349 = vxor.u32 %v337, %v345
    %v350 = vxor.u32 %v338, %v346
    %v351 = vxor.u32 %v339, %v347
    %v352 = vshra.s32 %v348, 16
    %v353 = vshra.s32 %v349, 16
    %v354 = vshra.s32 %v350, 16
    %v355 = vshra.s32 %v351, 16
    %v356 = vand.u32 %v352, 65535
    %v357 = vand.u32 %v353, 65535
    %v358 = vand.u32 %v354, 65535
    %v359 = vand.u32 %v355, 65535
    %v360 = vadd.s32 %v298, %v356
    %v361 = vadd.s32 %v299, %v357
    %v362 = vadd.s32 %v300, %v358
    %v363 = vadd.s32 %v301, %v359
    %v364 = vand.u32 %v348, 65535
    %v365 = vand.u32 %v349, 65535
    %v366 = vand.u32 %v350, 65535
    %v367 = vand.u32 %v351, 65535
    %v368 = vadd.s32 %v360, %v364
    %v369 = vadd.s32 %v361, %v365
    %v370 = vadd.s32 %v362, %v366
    %v371 = vadd.s32 %v363, %v367
    %s372 = sadd.s32 %s10, 387276957
    %v373 = vstv %s372
    %v374 = vxor.u32 %v23, %v373
    %v375 = vxor.u32 %v24, %v373
    %v376 = vxor.u32 %v25, %v373
    %v377 = vxor.u32 %v26, %v373
    %v378 = vshra.s32 %v374, 16
    %v379 = vshra.s32 %v375, 16
    %v380 = vshra.s32 %v376, 16
    %v381 = vshra.s32 %v377, 16
    %v382 = vand.u32 %v378, 65535
    %v383 = vand.u32 %v379, 65535
    %v384 = vand.u32 %v380, 65535
    %v385 = vand.u32 %v381, 65535
    %v386 = vxor.u32 %v374, %v382
    %v387 = vxor.u32 %v375, %v383
    %v388 = vxor.u32 %v376, %v384
    %v389 = vxor.u32 %v377, %v385
    %v390 = vmul.u32 %v386, 2146121005
    %v391 = vmul.u32 %v387, 2146121005
    %v392 = vmul.u32 %v388, 2146121005
    %v393 = vmul.u32 %v389, 2146121005
    %v394 = vshra.s32 %v390, 15
    %v395 = vshra.s32 %v391, 15
    %v396 = vshra.s32 %v392, 15
    %v397 = vshra.s32 %v393, 15
    %v398 = vand.u32 %v394, 131071
    %v399 = vand.u32 %v395, 131071
    %v400 = vand.u32 %v396, 131071
    %v401 = vand.u32 %v397, 131071
    %v402 = vxor.u32 %v390, %v398
    %v403 = vxor.u32 %v391, %v399
    %v404 = vxor.u32 %v392, %v400
    %v405 = vxor.u32 %v393, %v401
    %v406 = vmul.u32 %v402, 2221713035
    %v407 = vmul.u32 %v403, 2221713035
    %v408 = vmul.u32 %v404, 2221713035
    %v409 = vmul.u32 %v405, 2221713035
    %v410 = vshra.s32 %v406, 16
    %v411 = vshra.s32 %v407, 16
    %v412 = vshra.s32 %v408, 16
    %v413 = vshra.s32 %v409, 16
    %v414 = vand.u32 %v410, 65535
    %v415 = vand.u32 %v411, 65535
    %v416 = vand.u32 %v412, 65535
    %v417 = vand.u32 %v413, 65535
    %v418 = vxor.u32 %v406, %v414
    %v419 = vxor.u32 %v407, %v415
    %v420 = vxor.u32 %v408, %v416
    %v421 = vxor.u32 %v409, %v417
    %v422 = vshra.s32 %v418, 16
    %v423 = vshra.s32 %v419, 16
    %v424 = vshra.s32 %v420, 16
    %v425 = vshra.s32 %v421, 16
    %v426 = vand.u32 %v422, 65535
    %v427 = vand.u32 %v423, 65535
    %v428 = vand.u32 %v424, 65535
    %v429 = vand.u32 %v425, 65535
    %v430 = vadd.s32 %v368, %v426
    %v431 = vadd.s32 %v369, %v427
    %v432 = vadd.s32 %v370, %v428
    %v433 = vadd.s32 %v371, %v429
    %v434 = vand.u32 %v418, 65535
    %v435 = vand.u32 %v419, 65535
    %v436 = vand.u32 %v420, 65535
    %v437 = vand.u32 %v421, 65535
    %v438 = vadd.s32 %v430, %v434
    %v439 = vadd.s32 %v431, %v435
    %v440 = vadd.s32 %v432, %v436
    %v441 = vadd.s32 %v433, %v437
    %v442 = vcvt.s32.f32 %v438
    %v443 = vcvt.s32.f32 %v439
    %v444 = vcvt.s32.f32 %v440
    %v445 = vcvt.s32.f32 %v441
    %v446 = vmul.f32 %v442, 1.5258789e-05
    %v447 = vmul.f32 %v443, 1.5258789e-05
    %v448 = vmul.f32 %v444, 1.5258789e-05
    %v449 = vmul.f32 %v445, 1.5258789e-05
    %v450 = vsub.f32 %v446, 6.0
    %v451 = vsub.f32 %v447, 6.0
    %v452 = vsub.f32 %v448, 6.0
    %v453 = vsub.f32 %v449, 6.0
    %454 = vst [vmem:[#allocation3] sm:$0xff] %v450
    %455 = vst [vmem:[#allocation3 + $0x8] sm:$0xff] %v451
    %456 = vst [vmem:[#allocation3 + $0x10] sm:$0xff] %v452
    %457 = vst [vmem:[#allocation3 + $0x18] sm:$0xff] %v453
    // Predicated region
    $region6: #{tpu_custom_call.1} parent=1 // pred_check
      _
    $region7: #{tpu_custom_call.1} parent=1 // pred_check_branch
      %459 = sbr.rel (0) target = $region9
    $region8: #{tpu_custom_call.1} parent=1 // pred_region
      %461 = vsyncadd [#allocation4], 0
      %s462 = sshll.u32 [#allocation3], 4
      %s463 = int_to_ptr.vmem [resolvable:$true] %s462
      %s464 = sshll.u32 %s1, 4
      %s465 = int_to_ptr.hbm [resolvable:$true] %s464
      %470 = dma.vmem_to_hbm [thread:$0]  %s463, 512, %s465, [#allocation4], 256, 256, 16
    $region9: #{tpu_custom_call.1} parent=1 // pred_fallthru
      _
    // Predicated region
    $region10: #{tpu_custom_call.1} parent=1 // pred_check
      _
    $region11: #{tpu_custom_call.1} parent=1 // pred_check_branch
      %472 = sbr.rel (0) target = $region13
    $region12: #{tpu_custom_call.1} parent=1 // pred_region
      %474 = dma.done [#allocation4], 512
    $region13: #{tpu_custom_call.1} parent=1 // pred_fallthru
      _
    %475 = vsyncpa [#allocation4], 1

</llo_original>
